<compile_context>
chip_gen: v7x
topology: tpu7x:2x2x1
jax: 0.10.0
libtpu: 0.0.40
codegen_flags: <defaults>
</compile_context>

<pallas_src>
import jax
import jax.numpy as jnp
from jax.experimental import pallas as pl
from jax.experimental.pallas import tpu as pltpu

# ---- model geometry (derived from the PyTorch module) ----------------------
# conv1: Conv2d(1, 10, (3, 5), stride=3, padding=0)
# input 12x8 -> conv out 4x2 (10 ch) -> MaxPool2d((2,1)) -> 2x2 -> flatten = 40
C_IN, C_OUT = 1, 10
KH, KW = 3, 5
SH, SW = 3, 3
H_IN, W_IN = 12, 8
HC, WC = 4, 2            # conv output spatial
HP, WP = 2, 2            # pooled output spatial
FLAT = C_OUT * HP * WP   # 40, matches nn.Linear(40, 20)
HID = 20
NUM_CLASSES = 5          # len(classes) is data-dependent; fixed deterministically
IN_FLAT = C_IN * H_IN * W_IN  # 96
OUT_PAD = 128            # lane-dense padded logits width
TILE_B_MAX = 1024        # batch rows per grid step (~0.4 MB/input buffer;
                         # comfortably inside scoped VMEM on v5e/v6e/v7x)


def _round_up(a, m):
    return (a + m - 1) // m * m


# ---------------------------- Pallas kernel ---------------------------------
def fused_kernel(x_ref, w0_ref, w1_ref, bc_ref, wf1_ref, bf1_ref,
                 wf2_ref, bf2_ref, o_ref):
    """conv(im2col-folded) + bias + ReLU + maxpool(2,1) + fc1 + ReLU + fc2.

    x_ref:   (TILE_B, 96)   flattened NCHW input rows
    w0/w1:   (96, 40)       effective conv weights for pool-row j=0 / j=1,
                            columns in torch.flatten (c, hp, w) order
    bc:      (1, 40)        conv bias broadcast to (c, hp, w) columns
    wf1:     (40, 20), bf1: (1, 20)
    wf2:     (20, 128), bf2: (1, 128)   (zero-padded beyond NUM_CLASSES)
    o_ref:   (TILE_B, 128)  lane-dense padded logits
    """
    x = x_ref[...]
    c0 = jnp.dot(x, w0_ref[...], preferred_element_type=jnp.float32)
    c1 = jnp.dot(x, w1_ref[...], preferred_element_type=jnp.float32)
    # max(relu(c0+b), relu(c1+b)) == relu(max(c0, c1) + b)
    pooled = jnp.maximum(jnp.maximum(c0, c1) + bc_ref[...], 0.0)   # (TILE_B, 40)
    h = jnp.maximum(
        jnp.dot(pooled, wf1_ref[...], preferred_element_type=jnp.float32)
        + bf1_ref[...], 0.0)
    o_ref[...] = (jnp.dot(h, wf2_ref[...], preferred_element_type=jnp.float32)
                  + bf2_ref[...])
    # TODO(synk): nn.Dropout(0.3) training-mode masking (pltpu.prng_seed /
    # prng_random_bits) not implemented; eval-mode dropout is the identity.


# ------------------------- one-time weight prep ------------------------------
def prepare_params(params):
    """Fold im2col + pool-row split into effective weights; pad fc2 to 128 lanes."""
    conv_w, conv_b, fc1_w, fc1_b, fc2_w, fc2_b = params

    f = jnp.arange(FLAT)                 # flat index = c*4 + hp*2 + w
    c = f // (HP * WP)
    hp = (f % (HP * WP)) // WP
    w = f % WP

    w_eff = [jnp.zeros((IN_FLAT, FLAT), jnp.float32) for _ in range(2)]
    for j in range(2):                   # row inside the (2,1) pool window
        h_conv = 2 * hp + j
        for kh in range(KH):
            for kw in range(KW):
                rows = (h_conv * SH + kh) * W_IN + (w * SW + kw)   # (40,)
                vals = conv_w[c, 0, kh, kw].astype(jnp.float32)     # (40,)
                w_eff[j] = w_eff[j].at[rows, f].set(vals)

    bc = jnp.repeat(conv_b.astype(jnp.float32), HP * WP).reshape(1, FLAT)
    wf1 = fc1_w.T.astype(jnp.float32)                       # (40, 20)
    bf1 = fc1_b.reshape(1, HID).astype(jnp.float32)
    wf2 = (jnp.zeros((HID, OUT_PAD), jnp.float32)
           .at[:, :NUM_CLASSES].set(fc2_w.T.astype(jnp.float32)))
    bf2 = (jnp.zeros((1, OUT_PAD), jnp.float32)
           .at[:, :NUM_CLASSES].set(fc2_b.astype(jnp.float32)))
    return w_eff[0], w_eff[1], bc, wf1, bf1, wf2, bf2


# ------------------------------ forward --------------------------------------
def net_forward(x, prepared):
    """x: (N, 1, 12, 8) NCHW float; returns (N, NUM_CLASSES) logits."""
    w0, w1, bc, wf1, bf1, wf2, bf2 = prepared
    n = x.shape[0]
    xf = x.astype(jnp.float32).reshape(n, IN_FLAT)

    tile_b = min(TILE_B_MAX, _round_up(max(n, 1), 8))
    n_pad = _round_up(n, tile_b)
    if n_pad != n:
        xf = jnp.pad(xf, ((0, n_pad - n), (0, 0)))

    out = pl.pallas_call(
        fused_kernel,
        out_shape=jax.ShapeDtypeStruct((n_pad, OUT_PAD), jnp.float32),
        grid=(n_pad // tile_b,),
        in_specs=[
            pl.BlockSpec((tile_b, IN_FLAT), lambda b: (b, 0)),
            pl.BlockSpec((IN_FLAT, FLAT), lambda b: (0, 0)),
            pl.BlockSpec((IN_FLAT, FLAT), lambda b: (0, 0)),
            pl.BlockSpec((1, FLAT), lambda b: (0, 0)),
            pl.BlockSpec((FLAT, HID), lambda b: (0, 0)),
            pl.BlockSpec((1, HID), lambda b: (0, 0)),
            pl.BlockSpec((HID, OUT_PAD), lambda b: (0, 0)),
            pl.BlockSpec((1, OUT_PAD), lambda b: (0, 0)),
        ],
        out_specs=pl.BlockSpec((tile_b, OUT_PAD), lambda b: (b, 0)),
        compiler_params=pltpu.CompilerParams(
            dimension_semantics=("parallel",)),
    )(xf, w0, w1, bc, wf1, bf1, wf2, bf2)

    return out[:n, :NUM_CLASSES]


# --------------------------- parameter init ---------------------------------
def init_params(key):
    ks = jax.random.split(key, 6)

    def uniform(k, shape, fan_in):
        b = 1.0 / jnp.sqrt(fan_in)
        return jax.random.uniform(k, shape, jnp.float32, -b, b)

    conv_w = uniform(ks[0], (C_OUT, C_IN, KH, KW), C_IN * KH * KW)
    conv_b = uniform(ks[1], (C_OUT,), C_IN * KH * KW)
    fc1_w = uniform(ks[2], (HID, FLAT), FLAT)            # PyTorch layout (out, in)
    fc1_b = uniform(ks[3], (HID,), FLAT)
    fc2_w = uniform(ks[4], (NUM_CLASSES, HID), HID)
    fc2_b = uniform(ks[5], (NUM_CLASSES,), HID)
    return conv_w, conv_b, fc1_w, fc1_b, fc2_w, fc2_b


if __name__ == "__main__":
    key = jax.random.PRNGKey(0)
    pkey, xkey = jax.random.split(key)
    params = init_params(pkey)
    prepared = prepare_params(params)     # one-time: fold im2col, transposes, padding

    # NCHW input, same convention as the PyTorch module.
    x = jax.random.normal(xkey, (2, C_IN, H_IN, W_IN), jnp.float32)

    out = jax.jit(net_forward)(x, prepared)
    jax.block_until_ready(out)
    assert out.shape == (2, NUM_CLASSES)
    print("KERNEL_OK")
</pallas_src>

<mosaic_0001>
module attributes {stable_mosaic.version = 11 : i64} {
  func.func @fused_kernel(%arg0: i32, %arg1: memref<8x96xf32, #tpu.memory_space<vmem>>, %arg2: memref<96x40xf32, #tpu.memory_space<vmem>>, %arg3: memref<96x40xf32, #tpu.memory_space<vmem>>, %arg4: memref<1x40xf32, #tpu.memory_space<vmem>>, %arg5: memref<40x20xf32, #tpu.memory_space<vmem>>, %arg6: memref<1x20xf32, #tpu.memory_space<vmem>>, %arg7: memref<20x128xf32, #tpu.memory_space<vmem>>, %arg8: memref<1x128xf32, #tpu.memory_space<vmem>>, %arg9: memref<8x128xf32, #tpu.memory_space<vmem>>) attributes {dimension_semantics = [#tpu.dimension_semantics<parallel>], iteration_bounds = array<i64: 1>, scalar_prefetch = 0 : i64, scratch_operands = 0 : i64, tpu.core_type = #tpu.core_type<tc>, window_params = [{transform_indices = @transform_0, window_bounds = array<i64: 8, 96>}, {pipeline_mode = #tpu.pipeline_mode<synchronous>, transform_indices = @transform_1, window_bounds = array<i64: 96, 40>}, {pipeline_mode = #tpu.pipeline_mode<synchronous>, transform_indices = @transform_2, window_bounds = array<i64: 96, 40>}, {pipeline_mode = #tpu.pipeline_mode<synchronous>, transform_indices = @transform_3, window_bounds = array<i64: 1, 40>}, {pipeline_mode = #tpu.pipeline_mode<synchronous>, transform_indices = @transform_4, window_bounds = array<i64: 40, 20>}, {pipeline_mode = #tpu.pipeline_mode<synchronous>, transform_indices = @transform_5, window_bounds = array<i64: 1, 20>}, {pipeline_mode = #tpu.pipeline_mode<synchronous>, transform_indices = @transform_6, window_bounds = array<i64: 20, 128>}, {pipeline_mode = #tpu.pipeline_mode<synchronous>, transform_indices = @transform_7, window_bounds = array<i64: 1, 128>}, {transform_indices = @transform_8, window_bounds = array<i64: 8, 128>}]} {
    %c0 = arith.constant 0 : index
    %c0_0 = arith.constant 0 : index
    %0 = vector.load %arg1[%c0, %c0_0] : memref<8x96xf32, #tpu.memory_space<vmem>>, vector<8x96xf32>
    %c0_1 = arith.constant 0 : index
    %c0_2 = arith.constant 0 : index
    %1 = vector.load %arg2[%c0_1, %c0_2] : memref<96x40xf32, #tpu.memory_space<vmem>>, vector<96x40xf32>
    %cst = arith.constant dense<0.000000e+00> : vector<8x40xf32>
    %2 = tpu.matmul %0, %1, %cst {dimension_numbers = #tpu.dot_dimension_numbers<[1], [0], [0], [1], [0, 0, 1, 1], [], []>} : vector<8x96xf32>, vector<96x40xf32>, vector<8x40xf32> -> vector<8x40xf32>
    %c0_3 = arith.constant 0 : index
    %c0_4 = arith.constant 0 : index
    %3 = vector.load %arg3[%c0_3, %c0_4] : memref<96x40xf32, #tpu.memory_space<vmem>>, vector<96x40xf32>
    %cst_5 = arith.constant dense<0.000000e+00> : vector<8x40xf32>
    %4 = tpu.matmul %0, %3, %cst_5 {dimension_numbers = #tpu.dot_dimension_numbers<[1], [0], [0], [1], [0, 0, 1, 1], [], []>} : vector<8x96xf32>, vector<96x40xf32>, vector<8x40xf32> -> vector<8x40xf32>
    %5 = arith.maximumf %2, %4 : vector<8x40xf32>
    %c0_6 = arith.constant 0 : index
    %c0_7 = arith.constant 0 : index
    %6 = vector.load %arg4[%c0_6, %c0_7] : memref<1x40xf32, #tpu.memory_space<vmem>>, vector<1x40xf32>
    %7 = vector.broadcast %6 : vector<1x40xf32> to vector<8x40xf32>
    %8 = arith.addf %5, %7 : vector<8x40xf32>
    %cst_8 = arith.constant 0.000000e+00 : f32
    %9 = vector.broadcast %cst_8 : f32 to vector<8x40xf32>
    %10 = arith.maximumf %8, %9 : vector<8x40xf32>
    %c0_9 = arith.constant 0 : index
    %c0_10 = arith.constant 0 : index
    %11 = vector.load %arg5[%c0_9, %c0_10] : memref<40x20xf32, #tpu.memory_space<vmem>>, vector<40x20xf32>
    %cst_11 = arith.constant dense<0.000000e+00> : vector<8x20xf32>
    %12 = tpu.matmul %10, %11, %cst_11 {dimension_numbers = #tpu.dot_dimension_numbers<[1], [0], [0], [1], [0, 0, 1, 1], [], []>} : vector<8x40xf32>, vector<40x20xf32>, vector<8x20xf32> -> vector<8x20xf32>
    %c0_12 = arith.constant 0 : index
    %c0_13 = arith.constant 0 : index
    %13 = vector.load %arg6[%c0_12, %c0_13] : memref<1x20xf32, #tpu.memory_space<vmem>>, vector<1x20xf32>
    %14 = vector.broadcast %13 : vector<1x20xf32> to vector<8x20xf32>
    %15 = arith.addf %12, %14 : vector<8x20xf32>
    %cst_14 = arith.constant 0.000000e+00 : f32
    %16 = vector.broadcast %cst_14 : f32 to vector<8x20xf32>
    %17 = arith.maximumf %15, %16 : vector<8x20xf32>
    %c0_15 = arith.constant 0 : index
    %c0_16 = arith.constant 0 : index
    %18 = vector.load %arg7[%c0_15, %c0_16] : memref<20x128xf32, #tpu.memory_space<vmem>>, vector<20x128xf32>
    %cst_17 = arith.constant dense<0.000000e+00> : vector<8x128xf32>
    %19 = tpu.matmul %17, %18, %cst_17 {dimension_numbers = #tpu.dot_dimension_numbers<[1], [0], [0], [1], [0, 0, 1, 1], [], []>} : vector<8x20xf32>, vector<20x128xf32>, vector<8x128xf32> -> vector<8x128xf32>
    %c0_18 = arith.constant 0 : index
    %c0_19 = arith.constant 0 : index
    %20 = vector.load %arg8[%c0_18, %c0_19] : memref<1x128xf32, #tpu.memory_space<vmem>>, vector<1x128xf32>
    %21 = vector.broadcast %20 : vector<1x128xf32> to vector<8x128xf32>
    %22 = arith.addf %19, %21 : vector<8x128xf32>
    %c0_20 = arith.constant 0 : index
    %c0_21 = arith.constant 0 : index
    %23 = vector.load %arg9[%c0_20, %c0_21] : memref<8x128xf32, #tpu.memory_space<vmem>>, vector<8x128xf32>
    tpu.vector_store %arg9[%c0_20, %c0_21], %22 {strides = array<i32>} : memref<8x128xf32, #tpu.memory_space<vmem>>, vector<8x128xf32>,
    return
  }
  func.func @transform_0(%arg0: i32) -> (i32, i32) {
    %c0_i32 = arith.constant 0 : i32
    %c0_i32_0 = arith.constant 0 : i32
    return %arg0, %c0_i32 : i32, i32
  }
  func.func @transform_1(%arg0: i32) -> (i32, i32) {
    %c0_i32 = arith.constant 0 : i32
    %c0_i32_0 = arith.constant 0 : i32
    %c0_i32_1 = arith.constant 0 : i32
    return %c0_i32, %c0_i32_0 : i32, i32
  }
  func.func @transform_2(%arg0: i32) -> (i32, i32) {
    %c0_i32 = arith.constant 0 : i32
    %c0_i32_0 = arith.constant 0 : i32
    %c0_i32_1 = arith.constant 0 : i32
    return %c0_i32, %c0_i32_0 : i32, i32
  }
  func.func @transform_3(%arg0: i32) -> (i32, i32) {
    %c0_i32 = arith.constant 0 : i32
    %c0_i32_0 = arith.constant 0 : i32
    %c0_i32_1 = arith.constant 0 : i32
    return %c0_i32, %c0_i32_0 : i32, i32
  }
  func.func @transform_4(%arg0: i32) -> (i32, i32) {
    %c0_i32 = arith.constant 0 : i32
    %c0_i32_0 = arith.constant 0 : i32
    %c0_i32_1 = arith.constant 0 : i32
    return %c0_i32, %c0_i32_0 : i32, i32
  }
  func.func @transform_5(%arg0: i32) -> (i32, i32) {
    %c0_i32 = arith.constant 0 : i32
    %c0_i32_0 = arith.constant 0 : i32
    %c0_i32_1 = arith.constant 0 : i32
    return %c0_i32, %c0_i32_0 : i32, i32
  }
  func.func @transform_6(%arg0: i32) -> (i32, i32) {
    %c0_i32 = arith.constant 0 : i32
    %c0_i32_0 = arith.constant 0 : i32
    %c0_i32_1 = arith.constant 0 : i32
    return %c0_i32, %c0_i32_0 : i32, i32
  }
  func.func @transform_7(%arg0: i32) -> (i32, i32) {
    %c0_i32 = arith.constant 0 : i32
    %c0_i32_0 = arith.constant 0 : i32
    %c0_i32_1 = arith.constant 0 : i32
    return %c0_i32, %c0_i32_0 : i32, i32
  }
  func.func @transform_8(%arg0: i32) -> (i32, i32) {
    %c0_i32 = arith.constant 0 : i32
    %c0_i32_0 = arith.constant 0 : i32
    return %arg0, %c0_i32 : i32, i32
  }
}

</mosaic_0001>

<llo_original>
// kernel: net_forward.1
$region0: #{net_forward.1}
  #allocation0 [shape = 'u32[]', space=smem, size = 0x4, offset = 0x4, fixed_abs, tag = 'smem constant byte address 0x4 - core index']
  #allocation1 [shape = 'u32[144,128]{1,0:T(1,128)}', space=vmem, size = 0x12000, scoped, tag = 'internal scratch']
  %s0 = inlined_call_operand.vmem [shape: f32[8,96], index: 0, kind: input, shape index: {}]
  %s1 = inlined_call_operand.vmem [shape: f32[96,40], index: 1, kind: input, shape index: {}]
  %s2 = inlined_call_operand.vmem [shape: f32[96,40], index: 2, kind: input, shape index: {}]
  %s3 = inlined_call_operand.vmem [shape: f32[1,40], index: 3, kind: input, shape index: {}]
  %s4 = inlined_call_operand.vmem [shape: f32[40,20], index: 4, kind: input, shape index: {}]
  %s5 = inlined_call_operand.vmem [shape: f32[1,20], index: 5, kind: input, shape index: {}]
  %s6 = inlined_call_operand.vmem [shape: f32[20,128], index: 6, kind: input, shape index: {}]
  %s7 = inlined_call_operand.vmem [shape: f32[1,128], index: 7, kind: input, shape index: {}]
  %s8 = inlined_call_operand.vmem [shape: f32[8,128], index: 8, kind: output, shape index: {}]
  %s9 = sld [smem:[#allocation0]]
  $region42: #{net_forward.1} parent=0
    _
  %s11 = ssub.s32 1, %s9
  %s12 = scalar_select 0, %s11, %s9
  // Predicated region
  $region2: #{net_forward.1} parent=0 // pred_check
    _
  $region3: #{net_forward.1} parent=0 // pred_check_branch
    %14 = sbr.rel (0) target = $region5
  $region4: #{net_forward.1} parent=0 // pred_region
    _
  $region5: #{net_forward.1} parent=0 // pred_fallthru
    _
  // Predicated region
  $region6: #{net_forward.1} parent=0 // pred_check
    _
  $region7: #{net_forward.1} parent=0 // pred_check_branch
    %16 = sbr.rel (0) target = $region9
  $region8: #{net_forward.1} parent=0 // pred_region
    _
  $region9: #{net_forward.1} parent=0 // pred_fallthru
    _
  // Predicated region
  $region10: #{net_forward.1} parent=0 // pred_check
    _
  $region11: #{net_forward.1} parent=0 // pred_check_branch
    %18 = sbr.rel (0) target = $region13
  $region12: #{net_forward.1} parent=0 // pred_region
    _
  $region13: #{net_forward.1} parent=0 // pred_fallthru
    _
  // Predicated region
  $region14: #{net_forward.1} parent=0 // pred_check
    _
  $region15: #{net_forward.1} parent=0 // pred_check_branch
    %20 = sbr.rel (0) target = $region17
  $region16: #{net_forward.1} parent=0 // pred_region
    _
  $region17: #{net_forward.1} parent=0 // pred_fallthru
    _
  // Predicated region
  $region18: #{net_forward.1} parent=0 // pred_check
    _
  $region19: #{net_forward.1} parent=0 // pred_check_branch
    %22 = sbr.rel (0) target = $region21
  $region20: #{net_forward.1} parent=0 // pred_region
    _
  $region21: #{net_forward.1} parent=0 // pred_fallthru
    _
  // Predicated region
  $region22: #{net_forward.1} parent=0 // pred_check
    _
  $region23: #{net_forward.1} parent=0 // pred_check_branch
    %24 = sbr.rel (0) target = $region25
  $region24: #{net_forward.1} parent=0 // pred_region
    _
  $region25: #{net_forward.1} parent=0 // pred_fallthru
    _
  // Predicated region
  $region26: #{net_forward.1} parent=0 // pred_check
    _
  $region27: #{net_forward.1} parent=0 // pred_check_branch
    %26 = sbr.rel (0) target = $region29
  $region28: #{net_forward.1} parent=0 // pred_region
    _
  $region29: #{net_forward.1} parent=0 // pred_fallthru
    _
  // Predicated region
  $region30: #{net_forward.1} parent=0 // pred_check
    _
  $region31: #{net_forward.1} parent=0 // pred_check_branch
    %28 = sbr.rel (0) target = $region33
  $region32: #{net_forward.1} parent=0 // pred_region
    _
  $region33: #{net_forward.1} parent=0 // pred_fallthru
    _
  %v29 = vld [vmem:[%s0] sm:$0xff]
  %v30 = vld [vmem:[%s1] sm:$0xff]
  %v31 = vld [vmem:[%s1 + $0x8] sm:$0xff]
  %v32 = vld [vmem:[%s1 + $0x10] sm:$0xff]
  %v33 = vld [vmem:[%s1 + $0x18] sm:$0xff]
  %v34 = vld [vmem:[%s1 + $0x20] sm:$0xff]
  %v35 = vld [vmem:[%s1 + $0x28] sm:$0xff]
  %v36 = vld [vmem:[%s1 + $0x30] sm:$0xff]
  %v37 = vld [vmem:[%s1 + $0x38] sm:$0xff]
  %v38 = vld [vmem:[%s1 + $0x40] sm:$0xff]
  %v39 = vld [vmem:[%s1 + $0x48] sm:$0xff]
  %v40 = vld [vmem:[%s1 + $0x50] sm:$0xff]
  %v41 = vld [vmem:[%s1 + $0x58] sm:$0xff]
  %vm42 = vcmask 785408
  %v44 = vsel %vm42, %v29, 0
  %46 = vmatprep.subr.mxu0 0.0
  %47 = vmatpush1.msra.mxu0 %v30
  %48 = vmatprep.subr.mxu0 0.0
  %49 = vmatpush1.msra.mxu0 %v31
  %50 = vmatprep.subr.mxu0 0.0
  %51 = vmatpush1.msra.mxu0 %v32
  %52 = vmatprep.subr.mxu0 0.0
  %53 = vmatpush1.msra.mxu0 %v33
  %54 = vmatprep.subr.mxu0 0.0
  %55 = vmatpush1.msra.mxu0 %v34
  %56 = vmatprep.subr.mxu0 0.0
  %57 = vmatpush1.msra.mxu0 %v35
  %58 = vmatprep.subr.mxu0 0.0
  %59 = vmatpush1.msra.mxu0 %v36
  %60 = vmatprep.subr.mxu0 0.0
  %61 = vmatpush1.msra.mxu0 %v37
  %62 = vmatprep.subr.mxu0 0.0
  %63 = vmatpush1.msra.mxu0 %v38
  %64 = vmatprep.subr.mxu0 0.0
  %65 = vmatpush1.msra.mxu0 %v39
  %66 = vmatprep.subr.mxu0 0.0
  %67 = vmatpush1.msra.mxu0 %v40
  %68 = vmatprep.subr.mxu0 0.0
  %69 = vmatpush1.msra.mxu0 %v41
  %70 = vmatprep.subr.mxu0 0.0
  %71 = vmatpush1.msra.mxu0 0.0
  %72 = vmatprep.subr.mxu0 0.0
  %73 = vmatpush1.msra.mxu0 0.0
  %74 = vmatprep.subr.mxu0 0.0
  %75 = vmatpush1.msra.mxu0 0.0
  %76 = vmatprep.subr.mxu0 0.0
  %77 = vmatpush1.msra.mxu0 0.0
  %78 = vmatprep.subr.mxu0 0.0
  %79 = vmatpush1.msra.mxu0 0.0
  %80 = vmatprep.subr.mxu0 0.0
  %81 = vmatpush1.msra.mxu0 0.0
  %82 = vmatprep.subr.mxu0 0.0
  %83 = vmatpush1.msra.mxu0 0.0
  %84 = vmatprep.subr.mxu0 0.0
  %85 = vmatpush1.msra.mxu0 0.0
  %86 = vmatprep.subr.mxu0 0.0
  %87 = vmatpush1.msra.mxu0 0.0
  %88 = vmatprep.subr.mxu0 0.0
  %89 = vmatpush1.msra.mxu0 0.0
  %90 = vmatprep.subr.mxu0 0.0
  %91 = vmatpush1.msra.mxu0 0.0
  %92 = vmatprep.subr.mxu0 0.0
  %93 = vmatpush1.msra.mxu0 0.0
  %94 = vmatprep.subr.mxu0 0.0
  %95 = vmatpush1.msra.mxu0 0.0
  %96 = vmatprep.subr.mxu0 0.0
  %97 = vmatpush1.msra.mxu0 0.0
  %98 = vmatprep.subr.mxu0 0.0
  %99 = vmatpush1.msra.mxu0 0.0
  %100 = vmatprep.subr.mxu0 0.0
  %101 = vmatpush1.msra.mxu0 0.0
  %102 = vmatprep.subr.mxu0 0.0
  %103 = vmatpush1.msra.mxu0 0.0
  %104 = vmatprep.subr.mxu0 0.0
  %105 = vmatpush1.msra.mxu0 0.0
  %106 = vmatprep.subr.mxu0 0.0
  %107 = vmatpush1.msra.mxu0 0.0
  %108 = vmatprep.subr.mxu0 0.0
  %109 = vmatpush1.msra.mxu0 0.0
  %110 = vmatprep.mubr.f32.mxu0 0.0
  %111 = vmatmul.mubr.f32.gmra.mrb[0].mxu0 %v44
  %v112 = vpop.f32.mrb[0].mxu0
  %v113 = vadd.f32 0.0, %v112
  %v114 = vpop.f32.mrb[0].mxu0
  %115 = vdwg.mxu0
  %v116 = vld [vmem:[%s2] sm:$0xff]
  %v117 = vld [vmem:[%s2 + $0x8] sm:$0xff]
  %v118 = vld [vmem:[%s2 + $0x10] sm:$0xff]
  %v119 = vld [vmem:[%s2 + $0x18] sm:$0xff]
  %v120 = vld [vmem:[%s2 + $0x20] sm:$0xff]
  %v121 = vld [vmem:[%s2 + $0x28] sm:$0xff]
  %v122 = vld [vmem:[%s2 + $0x30] sm:$0xff]
  %v123 = vld [vmem:[%s2 + $0x38] sm:$0xff]
  %v124 = vld [vmem:[%s2 + $0x40] sm:$0xff]
  %v125 = vld [vmem:[%s2 + $0x48] sm:$0xff]
  %v126 = vld [vmem:[%s2 + $0x50] sm:$0xff]
  %v127 = vld [vmem:[%s2 + $0x58] sm:$0xff]
  %128 = vmatprep.subr.mxu0 0.0
  %129 = vmatpush1.msra.mxu0 %v116
  %130 = vmatprep.subr.mxu0 0.0
  %131 = vmatpush1.msra.mxu0 %v117
  %132 = vmatprep.subr.mxu0 0.0
  %133 = vmatpush1.msra.mxu0 %v118
  %134 = vmatprep.subr.mxu0 0.0
  %135 = vmatpush1.msra.mxu0 %v119
  %136 = vmatprep.subr.mxu0 0.0
  %137 = vmatpush1.msra.mxu0 %v120
  %138 = vmatprep.subr.mxu0 0.0
  %139 = vmatpush1.msra.mxu0 %v121
  %140 = vmatprep.subr.mxu0 0.0
  %141 = vmatpush1.msra.mxu0 %v122
  %142 = vmatprep.subr.mxu0 0.0
  %143 = vmatpush1.msra.mxu0 %v123
  %144 = vmatprep.subr.mxu0 0.0
  %145 = vmatpush1.msra.mxu0 %v124
  %146 = vmatprep.subr.mxu0 0.0
  %147 = vmatpush1.msra.mxu0 %v125
  %148 = vmatprep.subr.mxu0 0.0
  %149 = vmatpush1.msra.mxu0 %v126
  %150 = vmatprep.subr.mxu0 0.0
  %151 = vmatpush1.msra.mxu0 %v127
  %152 = vmatprep.subr.mxu0 0.0
  %153 = vmatpush1.msra.mxu0 0.0
  %154 = vmatprep.subr.mxu0 0.0
  %155 = vmatpush1.msra.mxu0 0.0
  %156 = vmatprep.subr.mxu0 0.0
  %157 = vmatpush1.msra.mxu0 0.0
  %158 = vmatprep.subr.mxu0 0.0
  %159 = vmatpush1.msra.mxu0 0.0
  %160 = vmatprep.subr.mxu0 0.0
  %161 = vmatpush1.msra.mxu0 0.0
  %162 = vmatprep.subr.mxu0 0.0
  %163 = vmatpush1.msra.mxu0 0.0
  %164 = vmatprep.subr.mxu0 0.0
  %165 = vmatpush1.msra.mxu0 0.0
  %166 = vmatprep.subr.mxu0 0.0
  %167 = vmatpush1.msra.mxu0 0.0
  %168 = vmatprep.subr.mxu0 0.0
  %169 = vmatpush1.msra.mxu0 0.0
  %170 = vmatprep.subr.mxu0 0.0
  %171 = vmatpush1.msra.mxu0 0.0
  %172 = vmatprep.subr.mxu0 0.0
  %173 = vmatpush1.msra.mxu0 0.0
  %174 = vmatprep.subr.mxu0 0.0
  %175 = vmatpush1.msra.mxu0 0.0
  %176 = vmatprep.subr.mxu0 0.0
  %177 = vmatpush1.msra.mxu0 0.0
  %178 = vmatprep.subr.mxu0 0.0
  %179 = vmatpush1.msra.mxu0 0.0
  %180 = vmatprep.subr.mxu0 0.0
  %181 = vmatpush1.msra.mxu0 0.0
  %182 = vmatprep.subr.mxu0 0.0
  %183 = vmatpush1.msra.mxu0 0.0
  %184 = vmatprep.subr.mxu0 0.0
  %185 = vmatpush1.msra.mxu0 0.0
  %186 = vmatprep.subr.mxu0 0.0
  %187 = vmatpush1.msra.mxu0 0.0
  %188 = vmatprep.subr.mxu0 0.0
  %189 = vmatpush1.msra.mxu0 0.0
  %190 = vmatprep.subr.mxu0 0.0
  %191 = vmatpush1.msra.mxu0 0.0
  %192 = vmatprep.mubr.f32.mxu0 0.0
  %193 = vmatmul.mubr.f32.gmra.mrb[0].mxu0 %v44
  %v194 = vpop.f32.mrb[0].mxu0
  %v195 = vadd.f32 0.0, %v194
  %v196 = vpop.f32.mrb[0].mxu0
  %197 = vdwg.mxu0
  %v198 = vmax.f32 %v113, %v195
  %v199 = vld [vmem:[%s3] sm:$0x1]
  %v201 = vlaneseq
  %v202 = vshrl.u32 %v201, 7
  %v203 = vsub.s32 0, %v202
  %v204 = vrot.slane %v199, %v203
  %v206 = vadd.f32 %v198, %v204
  %v207 = vmax.f32 %v206, 0.0
  %v208 = vld [vmem:[%s4] sm:$0xff]
  %v209 = vld [vmem:[%s4 + $0x8] sm:$0xff]
  %v210 = vld [vmem:[%s4 + $0x10] sm:$0xff]
  %v211 = vld [vmem:[%s4 + $0x18] sm:$0xff]
  %v212 = vld [vmem:[%s4 + $0x20] sm:$0xff]
  %v213 = vld [vmem:[%s5] sm:$0x1]
  %v215 = vlaneseq
  %v216 = vshrl.u32 %v215, 7
  %v217 = vsub.s32 0, %v216
  %v218 = vrot.slane %v213, %v217
  %vm220 = vcmask 326656
  %v222 = vsel %vm220, %v207, 0
  %224 = vmatprep.subr.mxu0 0.0
  %225 = vmatpush1.msra.mxu0 %v208
  %226 = vmatprep.subr.mxu0 0.0
  %227 = vmatpush1.msra.mxu0 %v209
  %228 = vmatprep.subr.mxu0 0.0
  %229 = vmatpush1.msra.mxu0 %v210
  %230 = vmatprep.subr.mxu0 0.0
  %231 = vmatpush1.msra.mxu0 %v211
  %232 = vmatprep.subr.mxu0 0.0
  %233 = vmatpush1.msra.mxu0 %v212
  %234 = vmatprep.subr.mxu0 0.0
  %235 = vmatpush1.msra.mxu0 0.0
  %236 = vmatprep.subr.mxu0 0.0
  %237 = vmatpush1.msra.mxu0 0.0
  %238 = vmatprep.subr.mxu0 0.0
  %239 = vmatpush1.msra.mxu0 0.0
  %240 = vmatprep.subr.mxu0 0.0
  %241 = vmatpush1.msra.mxu0 0.0
  %242 = vmatprep.subr.mxu0 0.0
  %243 = vmatpush1.msra.mxu0 0.0
  %244 = vmatprep.subr.mxu0 0.0
  %245 = vmatpush1.msra.mxu0 0.0
  %246 = vmatprep.subr.mxu0 0.0
  %247 = vmatpush1.msra.mxu0 0.0
  %248 = vmatprep.subr.mxu0 0.0
  %249 = vmatpush1.msra.mxu0 0.0
  %250 = vmatprep.subr.mxu0 0.0
  %251 = vmatpush1.msra.mxu0 0.0
  %252 = vmatprep.subr.mxu0 0.0
  %253 = vmatpush1.msra.mxu0 0.0
  %254 = vmatprep.subr.mxu0 0.0
  %255 = vmatpush1.msra.mxu0 0.0
  %256 = vmatprep.subr.mxu0 0.0
  %257 = vmatpush1.msra.mxu0 0.0
  %258 = vmatprep.subr.mxu0 0.0
  %259 = vmatpush1.msra.mxu0 0.0
  %260 = vmatprep.subr.mxu0 0.0
  %261 = vmatpush1.msra.mxu0 0.0
  %262 = vmatprep.subr.mxu0 0.0
  %263 = vmatpush1.msra.mxu0 0.0
  %264 = vmatprep.subr.mxu0 0.0
  %265 = vmatpush1.msra.mxu0 0.0
  %266 = vmatprep.subr.mxu0 0.0
  %267 = vmatpush1.msra.mxu0 0.0
  %268 = vmatprep.subr.mxu0 0.0
  %269 = vmatpush1.msra.mxu0 0.0
  %270 = vmatprep.subr.mxu0 0.0
  %271 = vmatpush1.msra.mxu0 0.0
  %272 = vmatprep.subr.mxu0 0.0
  %273 = vmatpush1.msra.mxu0 0.0
  %274 = vmatprep.subr.mxu0 0.0
  %275 = vmatpush1.msra.mxu0 0.0
  %276 = vmatprep.subr.mxu0 0.0
  %277 = vmatpush1.msra.mxu0 0.0
  %278 = vmatprep.subr.mxu0 0.0
  %279 = vmatpush1.msra.mxu0 0.0
  %280 = vmatprep.subr.mxu0 0.0
  %281 = vmatpush1.msra.mxu0 0.0
  %282 = vmatprep.subr.mxu0 0.0
  %283 = vmatpush1.msra.mxu0 0.0
  %284 = vmatprep.subr.mxu0 0.0
  %285 = vmatpush1.msra.mxu0 0.0
  %286 = vmatprep.subr.mxu0 0.0
  %287 = vmatpush1.msra.mxu0 0.0
  %288 = vmatprep.mubr.f32.mxu0 0.0
  %289 = vmatmul.mubr.f32.gmra.mrb[0].mxu0 %v222
  %v290 = vpop.f32.mrb[0].mxu0
  %v291 = vadd.f32 %v218, %v290
  %v292 = vpop.f32.mrb[0].mxu0
  %293 = vdwg.mxu0
  %v294 = vmax.f32 %v291, 0.0
  %v295 = vld [vmem:[%s6] sm:$0xff]
  %v296 = vld [vmem:[%s6 + $0x8] sm:$0xff]
  %v297 = vld [vmem:[%s6 + $0x10] sm:$0xf]
  %v298 = vld [vmem:[%s7] sm:$0x1]
  %v300 = vlaneseq
  %v301 = vshrl.u32 %v300, 7
  %v302 = vsub.s32 0, %v301
  %v303 = vrot.slane %v298, %v302
  %vm305 = vcmask 162816
  %v307 = vsel %vm305, %v294, 0
  %vm309 = vcmask 1043456
  %v311 = vsel %vm309, %v297, 0
  %313 = vmatprep.subr.mxu0 0.0
  %314 = vmatpush1.msra.mxu0 %v295
  %315 = vmatprep.subr.mxu0 0.0
  %316 = vmatpush1.msra.mxu0 %v296
  %317 = vmatprep.subr.mxu0 0.0
  %318 = vmatpush1.msra.mxu0 %v311
  %319 = vmatprep.subr.mxu0 0.0
  %320 = vmatpush1.msra.mxu0 0.0
  %321 = vmatprep.subr.mxu0 0.0
  %322 = vmatpush1.msra.mxu0 0.0
  %323 = vmatprep.subr.mxu0 0.0
  %324 = vmatpush1.msra.mxu0 0.0
  %325 = vmatprep.subr.mxu0 0.0
  %326 = vmatpush1.msra.mxu0 0.0
  %327 = vmatprep.subr.mxu0 0.0
  %328 = vmatpush1.msra.mxu0 0.0
  %329 = vmatprep.subr.mxu0 0.0
  %330 = vmatpush1.msra.mxu0 0.0
  %331 = vmatprep.subr.mxu0 0.0
  %332 = vmatpush1.msra.mxu0 0.0
  %333 = vmatprep.subr.mxu0 0.0
  %334 = vmatpush1.msra.mxu0 0.0
  %335 = vmatprep.subr.mxu0 0.0
  %336 = vmatpush1.msra.mxu0 0.0
  %337 = vmatprep.subr.mxu0 0.0
  %338 = vmatpush1.msra.mxu0 0.0
  %339 = vmatprep.subr.mxu0 0.0
  %340 = vmatpush1.msra.mxu0 0.0
  %341 = vmatprep.subr.mxu0 0.0
  %342 = vmatpush1.msra.mxu0 0.0
  %343 = vmatprep.subr.mxu0 0.0
  %344 = vmatpush1.msra.mxu0 0.0
  %345 = vmatprep.subr.mxu0 0.0
  %346 = vmatpush1.msra.mxu0 0.0
  %347 = vmatprep.subr.mxu0 0.0
  %348 = vmatpush1.msra.mxu0 0.0
  %349 = vmatprep.subr.mxu0 0.0
  %350 = vmatpush1.msra.mxu0 0.0
  %351 = vmatprep.subr.mxu0 0.0
  %352 = vmatpush1.msra.mxu0 0.0
  %353 = vmatprep.subr.mxu0 0.0
  %354 = vmatpush1.msra.mxu0 0.0
  %355 = vmatprep.subr.mxu0 0.0
  %356 = vmatpush1.msra.mxu0 0.0
  %357 = vmatprep.subr.mxu0 0.0
  %358 = vmatpush1.msra.mxu0 0.0
  %359 = vmatprep.subr.mxu0 0.0
  %360 = vmatpush1.msra.mxu0 0.0
  %361 = vmatprep.subr.mxu0 0.0
  %362 = vmatpush1.msra.mxu0 0.0
  %363 = vmatprep.subr.mxu0 0.0
  %364 = vmatpush1.msra.mxu0 0.0
  %365 = vmatprep.subr.mxu0 0.0
  %366 = vmatpush1.msra.mxu0 0.0
  %367 = vmatprep.subr.mxu0 0.0
  %368 = vmatpush1.msra.mxu0 0.0
  %369 = vmatprep.subr.mxu0 0.0
  %370 = vmatpush1.msra.mxu0 0.0
  %371 = vmatprep.subr.mxu0 0.0
  %372 = vmatpush1.msra.mxu0 0.0
  %373 = vmatprep.subr.mxu0 0.0
  %374 = vmatpush1.msra.mxu0 0.0
  %375 = vmatprep.subr.mxu0 0.0
  %376 = vmatpush1.msra.mxu0 0.0
  %377 = vmatprep.mubr.f32.mxu0 0.0
  %378 = vmatmul.mubr.f32.gmra.mrb[0].mxu0 %v307
  %v379 = vpop.f32.mrb[0].mxu0
  %v380 = vadd.f32 %v303, %v379
  %v381 = vpop.f32.mrb[0].mxu0
  %382 = vdwg.mxu0
  %383 = vst [vmem:[%s8] sm:$0xff] %v380
  // Predicated region
  $region34: #{net_forward.1} parent=0 // pred_check
    _
  $region35: #{net_forward.1} parent=0 // pred_check_branch
    %385 = sbr.rel (0) target = $region37
  $region36: #{net_forward.1} parent=0 // pred_region
    _
  $region37: #{net_forward.1} parent=0 // pred_fallthru
    _
  // Predicated region
  $region38: #{net_forward.1} parent=0 // pred_check
    _
  $region39: #{net_forward.1} parent=0 // pred_check_branch
    %387 = sbr.rel (0) target = $region41
  $region40: #{net_forward.1} parent=0 // pred_region
    _
  $region41: #{net_forward.1} parent=0 // pred_fallthru
    _

</llo_original>
